<compile_context>
chip_gen: v7x
topology: tpu7x:2x2x1
jax: 0.10.0
libtpu: 0.0.40
codegen_flags: <defaults>
</compile_context>

<pallas_src>
import jax
import jax.numpy as jnp
from jax.experimental import pallas as pl


def _identity_kernel(x_hbm_ref, o_hbm_ref):
    # Output aliases input (input_output_aliases={0: 0}) and both refs stay in
    # their original HBM buffers (memory_space=pl.ANY).  The aliased output
    # buffer therefore already contains the input data on entry: there is
    # nothing to load, compute, store, or DMA.
    del x_hbm_ref, o_hbm_ref


def base_decoder_forward(x: jax.Array) -> jax.Array:
    """Pallas 'forward' for the abstract BaseDecoder: a zero-copy identity."""
    if x.size == 0:
        # Degenerate input; the base class defines no transform.
        return x

    return pl.pallas_call(
        _identity_kernel,
        out_shape=jax.ShapeDtypeStruct(x.shape, x.dtype),
        in_specs=[pl.BlockSpec(memory_space=pl.ANY)],   # raw HBM ref, no auto-DMA
        out_specs=pl.BlockSpec(memory_space=pl.ANY),    # raw HBM ref, no auto-DMA
        input_output_aliases={0: 0},                    # output buffer aliases input
        cost_estimate=pl.CostEstimate(
            flops=0, transcendentals=0, bytes_accessed=0
        ),
    )(x)


if __name__ == "__main__":
    key = jax.random.PRNGKey(0)
    # Small NCHW input consistent with a decoder-style feature map.
    x = jax.random.normal(key, (2, 4, 16, 16), dtype=jnp.float32)

    y = base_decoder_forward(x)
    y = jax.block_until_ready(y)

    # The abstract base class defines no transform -> output must equal input.
    assert y.shape == x.shape and y.dtype == x.dtype
    assert bool(jnp.all(y == x))

    print("KERNEL_OK")
</pallas_src>

<mosaic_0001>
module attributes {stable_mosaic.version = 11 : i64} {
  func.func @_identity_kernel(%arg0: memref<2x4x16x16xf32, #tpu.memory_space<any>>, %arg1: memref<2x4x16x16xf32, #tpu.memory_space<any>>) attributes {dimension_semantics = [], scalar_prefetch = 0 : i64, scratch_operands = 0 : i64, tpu.core_type = #tpu.core_type<tc>} {
    return
  }
}

</mosaic_0001>

<llo_original>
// kernel: tpu_custom_call.1
$region0: #{tpu_custom_call.1}
  #allocation0 [shape = 'u32[]', space=smem, size = 0x4, offset = 0x4, fixed_abs, tag = 'smem constant byte address 0x4 - core index']
  #allocation1 [shape = 'u32[144,128]{1,0:T(1,128)}', space=vmem, size = 0x12000, scoped, tag = 'internal scratch']
  %s0 = inlined_call_operand.hbm [shape: f32[2,4,16,16], index: 0, kind: input, shape index: {}, may-alias: {0,1}]
  %s1 = inlined_call_operand.hbm [shape: f32[2,4,16,16], index: 1, kind: output, shape index: {}, may-alias: {0,1}]
  %s2 = sld [smem:[#allocation0]]
  $region2: #{tpu_custom_call.1} parent=0
    _
  %s4 = ssub.s32 1, %s2
  %s5 = scalar_select 0, %s4, %s2

</llo_original>
